<compile_context>
chip_gen: v7x
topology: tpu7x:2x2x1
jax: 0.10.0
libtpu: 0.0.40
codegen_flags: <defaults>
</compile_context>

<pallas_src>
import jax
import jax.numpy as jnp
from jax.experimental import pallas as pl
from jax.experimental.pallas import tpu as pltpu


def temporal_moe_kernel(vec_ref, side_ref, aw_w_ref, aw_b_ref,
                        gate_wa_ref, expert_ref, out_ref):
    # side lanes: 0 = timestamp (f32); 1..E = gathered interval gate logits.
    E = expert_ref.shape[0]
    ts = side_ref[:, 0:1]                                              # (T, 1)

    # absolute (frequency-enhanced) time embedding; inv_freq already folded
    # into aw_w / aw_b in the glue:  cos((ts*w + b) * inv_freq) == cos(ts*w' + b')
    abs_emb = jnp.cos(ts * aw_w_ref[...] + aw_b_ref[...])              # (T, H)

    # gate logits = gathered interval part + absolute part
    logits = side_ref[:, 1:1 + E] + jnp.dot(
        abs_emb, gate_wa_ref[...], preferred_element_type=jnp.float32)  # (T, E)

    m = jnp.max(logits, axis=-1, keepdims=True)
    e = jnp.exp(logits - m)
    denom = jnp.sum(e, axis=-1, keepdims=True)
    # NOTE: approx reciprocal (EUP) -> softmax rows sum to 1 only to ~1e-4.
    route = e * pl.reciprocal(denom, approx=True)                      # (T, E)

    # expert mixing on the otherwise-idle MXU: (T, E) @ (E, 3H)
    mixed = jnp.dot(route, expert_ref[...], preferred_element_type=jnp.float32)
    out_ref[...] = (vec_ref[...].astype(jnp.float32) * mixed).astype(out_ref.dtype)


def temporal_moe_forward(vector, timestamp, params, *, interval_scale, tile=512):
    B, L, H3 = vector.shape
    H = H3 // 3
    N = B * L
    V = params['emb'].shape[0]
    E = params['expert'].shape[0]

    # ---- glue: interval index (diff / log2 / floor / prepend-zero / clamp) ----
    # TODO(synk): timestamps assumed non-decreasing (as in the dataset); negative
    # diffs would NaN in log2 exactly as in the PyTorch original, and indices past
    # the embedding table are clamped here whereas nn.Embedding would raise.
    # TODO(synk): phase computed in f32 (matches torch default); for ~1e9 unix
    # timestamps consider subtracting a per-sequence base in the glue.
    ts_f = timestamp.astype(jnp.float32)
    diff = ts_f[:, 1:] - ts_f[:, :-1]
    interval = jnp.log2(diff + 1.0)
    idx = jnp.floor(interval_scale * interval).astype(jnp.int32)
    idx = jnp.concatenate([jnp.zeros((B, 1), jnp.int32), idx], axis=1)
    idx = jnp.clip(idx, 0, V - 1)

    # interval embedding only feeds the gate -> fold it into a tiny (V, E) table,
    # gather the per-token gate logits here and ship them through the side array.
    emb_gate = (params['emb'].astype(jnp.float32) @ params['gate_wi'].astype(jnp.float32)
                + params['gate_b'].astype(jnp.float32))                # (V, E)
    logits_int = emb_gate[idx.reshape(N)]                              # (N, E)

    # fold inv_freq into the absolute-time affine weights
    aw_w = (params['aw_w'] * params['inv_freq']).astype(jnp.float32)   # (1, H)
    aw_b = (params['aw_b'] * params['inv_freq']).astype(jnp.float32)   # (1, H)

    # pack timestamp + interval gate logits into ONE small side array
    side_w = max(8, 1 + E)
    side = jnp.zeros((N, side_w), jnp.float32)
    side = side.at[:, 0].set(ts_f.reshape(N))
    side = side.at[:, 1:1 + E].set(logits_int)

    # ---- tiling: rows only; last dim stays the full 3H (no lane pad / cast) ----
    rows8 = ((N + 7) // 8) * 8
    tile = max(8, min(tile, rows8))
    if rows8 // tile < 2 and rows8 >= 16:
        # keep >= 2 grid steps so both v7x TensorCores get work
        tile = ((rows8 // 2 + 7) // 8) * 8
    n_tiles = (N + tile - 1) // tile
    N_pad = n_tiles * tile

    vec2d = vector.reshape(N, H3)
    if N_pad != N:
        vec2d = jnp.pad(vec2d, ((0, N_pad - N), (0, 0)))
        side = jnp.pad(side, ((0, N_pad - N), (0, 0)))

    def row_spec(shape):
        return pl.BlockSpec(shape, lambda i: (i, 0))

    def full_spec(shape):
        return pl.BlockSpec(shape, lambda i: (0, 0))

    out = pl.pallas_call(
        temporal_moe_kernel,
        out_shape=jax.ShapeDtypeStruct((N_pad, H3), vector.dtype),
        grid=(n_tiles,),
        in_specs=[
            row_spec((tile, H3)),        # vector rows (full last dim, no pad/cast)
            row_spec((tile, side_w)),    # packed [timestamp, interval gate logits]
            full_spec((1, H)),           # absolute_w weight (inv_freq folded in)
            full_spec((1, H)),           # absolute_w bias   (inv_freq folded in)
            full_spec((H, E)),           # gate weight, absolute half (W^T)
            full_spec((E, H3)),          # stacked expert parameters
        ],
        out_specs=row_spec((tile, H3)),
        compiler_params=pltpu.CompilerParams(dimension_semantics=("parallel",)),
    )(vec2d, side, aw_w, aw_b,
      params['gate_wa'].astype(jnp.float32),
      params['expert'].astype(jnp.float32))

    out = out[:N].reshape(B, L, H3)
    # TODO(synk): if the consumer can take the packed (B, L, 3H) slab, return
    # `out` directly and skip these strided last-dim slices (saves ~a full
    # read+write of the output).
    return out[:, :, :H], out[:, :, H:2 * H], out[:, :, 2 * H:]


def reference_forward(vector, timestamp, params, *, interval_scale):
    """Pure-JAX mirror of the PyTorch forward for correctness checking."""
    B, L, H3 = vector.shape
    H = H3 // 3
    V = params['emb'].shape[0]
    abs_emb = jnp.cos((timestamp[..., None] * params['aw_w'][0]
                       + params['aw_b'][0]) * params['inv_freq'][0])
    diff = timestamp[:, 1:] - timestamp[:, :-1]
    interval = jnp.log2(diff + 1.0)
    idx = jnp.floor(interval_scale * interval).astype(jnp.int32)
    idx = jnp.concatenate([jnp.zeros((B, 1), jnp.int32), idx], axis=1)
    idx = jnp.clip(idx, 0, V - 1)
    int_emb = params['emb'][idx]
    gate_in = jnp.concatenate([int_emb, abs_emb], axis=-1)
    gate_w = jnp.concatenate([params['gate_wi'], params['gate_wa']], axis=0)
    logits = gate_in @ gate_w + params['gate_b'][0]
    route = jax.nn.softmax(logits, axis=-1)
    expert_out = vector[:, :, None, :] * params['expert'][None, None, :, :]
    proba = jnp.sum(expert_out * route[..., None], axis=2)
    return proba[..., :H], proba[..., H:2 * H], proba[..., 2 * H:]


if __name__ == "__main__":
    key = jax.random.PRNGKey(0)
    B, L, H, E = 2, 8, 32, 4
    interval_scale = 1.0
    # TODO(synk): get_interval_num() reads a pickle from disk in the original
    # module; a synthetic interval_num is used instead.
    interval_num = 40
    V = int(interval_scale * interval_num) + 1

    k = jax.random.split(key, 9)
    vector = jax.random.normal(k[0], (B, L, 3 * H), jnp.float32)
    gaps = jax.random.uniform(k[1], (B, L), jnp.float32, minval=1.0, maxval=500.0)
    timestamp = jnp.cumsum(gaps, axis=1)  # strictly increasing timestamps

    params = {
        'aw_w': jax.random.normal(k[2], (1, H), jnp.float32) * 0.05,
        'aw_b': jax.random.normal(k[3], (1, H), jnp.float32) * 0.05,
        'inv_freq': (1.0 / (10000.0 ** (jnp.arange(H, dtype=jnp.float32) / H))
                     ).reshape(1, H),
        'emb': jax.random.normal(k[4], (V, H), jnp.float32) * 0.1,
        'gate_wi': jax.random.normal(k[5], (H, E), jnp.float32) * 0.1,
        'gate_wa': jax.random.normal(k[6], (H, E), jnp.float32) * 0.1,
        'gate_b': jax.random.normal(k[7], (1, E), jnp.float32) * 0.1,
        'expert': jax.random.normal(k[8], (E, 3 * H), jnp.float32) * 0.1,
    }

    outs = temporal_moe_forward(vector, timestamp, params,
                                interval_scale=interval_scale)
    outs = jax.block_until_ready(outs)

    refs = reference_forward(vector, timestamp, params,
                             interval_scale=interval_scale)
    for o, r in zip(outs, refs):
        err = float(jnp.max(jnp.abs(o - r)))
        # tolerance widened slightly for the approx (EUP) softmax reciprocal
        assert jnp.allclose(o, r, atol=2e-3, rtol=2e-3), f"max abs err {err}"

    print("KERNEL_OK")
</pallas_src>

<mosaic_0001>
module attributes {stable_mosaic.version = 11 : i64} {
  func.func @temporal_moe_kernel(%arg0: i32, %arg1: memref<8x96xf32, #tpu.memory_space<vmem>>, %arg2: memref<8x8xf32, #tpu.memory_space<vmem>>, %arg3: memref<1x32xf32, #tpu.memory_space<vmem>>, %arg4: memref<1x32xf32, #tpu.memory_space<vmem>>, %arg5: memref<32x4xf32, #tpu.memory_space<vmem>>, %arg6: memref<4x96xf32, #tpu.memory_space<vmem>>, %arg7: memref<8x96xf32, #tpu.memory_space<vmem>>) attributes {dimension_semantics = [#tpu.dimension_semantics<parallel>], iteration_bounds = array<i64: 2>, scalar_prefetch = 0 : i64, scratch_operands = 0 : i64, tpu.core_type = #tpu.core_type<tc>, window_params = [{transform_indices = @transform_0, window_bounds = array<i64: 8, 96>}, {transform_indices = @transform_1, window_bounds = array<i64: 8, 8>}, {pipeline_mode = #tpu.pipeline_mode<synchronous>, transform_indices = @transform_2, window_bounds = array<i64: 1, 32>}, {pipeline_mode = #tpu.pipeline_mode<synchronous>, transform_indices = @transform_3, window_bounds = array<i64: 1, 32>}, {pipeline_mode = #tpu.pipeline_mode<synchronous>, transform_indices = @transform_4, window_bounds = array<i64: 32, 4>}, {pipeline_mode = #tpu.pipeline_mode<synchronous>, transform_indices = @transform_5, window_bounds = array<i64: 4, 96>}, {transform_indices = @transform_6, window_bounds = array<i64: 8, 96>}]} {
    %c0 = arith.constant 0 : index
    %c0_0 = arith.constant 0 : index
    %0 = vector.load %arg2[%c0, %c0_0] : memref<8x8xf32, #tpu.memory_space<vmem>>, vector<8x1xf32>
    %c0_1 = arith.constant 0 : index
    %c0_2 = arith.constant 0 : index
    %1 = vector.load %arg3[%c0_1, %c0_2] : memref<1x32xf32, #tpu.memory_space<vmem>>, vector<1x32xf32>
    %2 = vector.broadcast %0 : vector<8x1xf32> to vector<8x32xf32>
    %3 = vector.broadcast %1 : vector<1x32xf32> to vector<8x32xf32>
    %4 = arith.mulf %2, %3 : vector<8x32xf32>
    %c0_3 = arith.constant 0 : index
    %c0_4 = arith.constant 0 : index
    %5 = vector.load %arg4[%c0_3, %c0_4] : memref<1x32xf32, #tpu.memory_space<vmem>>, vector<1x32xf32>
    %6 = vector.broadcast %5 : vector<1x32xf32> to vector<8x32xf32>
    %7 = arith.addf %4, %6 : vector<8x32xf32>
    %8 = math.cos %7 : vector<8x32xf32>
    %c0_5 = arith.constant 0 : index
    %c1 = arith.constant 1 : index
    %9 = vector.load %arg2[%c0_5, %c1] : memref<8x8xf32, #tpu.memory_space<vmem>>, vector<8x4xf32>
    %c0_6 = arith.constant 0 : index
    %c0_7 = arith.constant 0 : index
    %10 = vector.load %arg5[%c0_6, %c0_7] : memref<32x4xf32, #tpu.memory_space<vmem>>, vector<32x4xf32>
    %cst = arith.constant dense<0.000000e+00> : vector<8x4xf32>
    %11 = tpu.matmul %8, %10, %cst {dimension_numbers = #tpu.dot_dimension_numbers<[1], [0], [0], [1], [0, 0, 1, 1], [], []>} : vector<8x32xf32>, vector<32x4xf32>, vector<8x4xf32> -> vector<8x4xf32>
    %12 = arith.addf %9, %11 : vector<8x4xf32>
    %cst_8 = arith.constant dense<0xFF800000> : vector<8xf32>
    %13 = vector.multi_reduction <maximumf>, %12, %cst_8 [1] : vector<8x4xf32> to vector<8xf32>
    %14 = vector.shape_cast %13 : vector<8xf32> to vector<8x1xf32>
    %15 = vector.broadcast %14 : vector<8x1xf32> to vector<8x4xf32>
    %16 = arith.subf %12, %15 : vector<8x4xf32>
    %17 = math.exp %16 : vector<8x4xf32>
    %cst_9 = arith.constant dense<0.000000e+00> : vector<8xf32>
    %18 = vector.multi_reduction <add>, %17, %cst_9 [1] : vector<8x4xf32> to vector<8xf32>
    %19 = vector.shape_cast %18 : vector<8xf32> to vector<8x1xf32>
    %20 = tpu.reciprocal %19 {approx = true} : vector<8x1xf32> -> vector<8x1xf32>
    %21 = vector.broadcast %20 : vector<8x1xf32> to vector<8x4xf32>
    %22 = arith.mulf %17, %21 : vector<8x4xf32>
    %c0_10 = arith.constant 0 : index
    %c0_11 = arith.constant 0 : index
    %23 = vector.load %arg6[%c0_10, %c0_11] : memref<4x96xf32, #tpu.memory_space<vmem>>, vector<4x96xf32>
    %cst_12 = arith.constant dense<0.000000e+00> : vector<8x96xf32>
    %24 = tpu.matmul %22, %23, %cst_12 {dimension_numbers = #tpu.dot_dimension_numbers<[1], [0], [0], [1], [0, 0, 1, 1], [], []>} : vector<8x4xf32>, vector<4x96xf32>, vector<8x96xf32> -> vector<8x96xf32>
    %c0_13 = arith.constant 0 : index
    %c0_14 = arith.constant 0 : index
    %25 = vector.load %arg1[%c0_13, %c0_14] : memref<8x96xf32, #tpu.memory_space<vmem>>, vector<8x96xf32>
    %26 = arith.mulf %25, %24 : vector<8x96xf32>
    %c0_15 = arith.constant 0 : index
    %c0_16 = arith.constant 0 : index
    %27 = vector.load %arg7[%c0_15, %c0_16] : memref<8x96xf32, #tpu.memory_space<vmem>>, vector<8x96xf32>
    tpu.vector_store %arg7[%c0_15, %c0_16], %26 {strides = array<i32>} : memref<8x96xf32, #tpu.memory_space<vmem>>, vector<8x96xf32>,
    return
  }
  func.func @transform_0(%arg0: i32) -> (i32, i32) {
    %c0_i32 = arith.constant 0 : i32
    %c0_i32_0 = arith.constant 0 : i32
    return %arg0, %c0_i32 : i32, i32
  }
  func.func @transform_1(%arg0: i32) -> (i32, i32) {
    %c0_i32 = arith.constant 0 : i32
    %c0_i32_0 = arith.constant 0 : i32
    return %arg0, %c0_i32 : i32, i32
  }
  func.func @transform_2(%arg0: i32) -> (i32, i32) {
    %c0_i32 = arith.constant 0 : i32
    %c0_i32_0 = arith.constant 0 : i32
    %c0_i32_1 = arith.constant 0 : i32
    return %c0_i32, %c0_i32_0 : i32, i32
  }
  func.func @transform_3(%arg0: i32) -> (i32, i32) {
    %c0_i32 = arith.constant 0 : i32
    %c0_i32_0 = arith.constant 0 : i32
    %c0_i32_1 = arith.constant 0 : i32
    return %c0_i32, %c0_i32_0 : i32, i32
  }
  func.func @transform_4(%arg0: i32) -> (i32, i32) {
    %c0_i32 = arith.constant 0 : i32
    %c0_i32_0 = arith.constant 0 : i32
    %c0_i32_1 = arith.constant 0 : i32
    return %c0_i32, %c0_i32_0 : i32, i32
  }
  func.func @transform_5(%arg0: i32) -> (i32, i32) {
    %c0_i32 = arith.constant 0 : i32
    %c0_i32_0 = arith.constant 0 : i32
    %c0_i32_1 = arith.constant 0 : i32
    return %c0_i32, %c0_i32_0 : i32, i32
  }
  func.func @transform_6(%arg0: i32) -> (i32, i32) {
    %c0_i32 = arith.constant 0 : i32
    %c0_i32_0 = arith.constant 0 : i32
    return %arg0, %c0_i32 : i32, i32
  }
}

</mosaic_0001>

<llo_original>
// kernel: tpu_custom_call.1
$region0: #{tpu_custom_call.1}
  #allocation0 [shape = 'u32[]', space=smem, size = 0x4, offset = 0x4, fixed_abs, tag = 'smem constant byte address 0x4 - core index']
  #allocation1 [shape = 'u32[144,128]{1,0:T(1,128)}', space=vmem, size = 0x12000, scoped, tag = 'internal scratch']
  %s0 = inlined_call_operand.vmem [shape: f32[16,96], index: 0, kind: input, shape index: {}]
  %s1 = inlined_call_operand.vmem [shape: f32[16,8], index: 1, kind: input, shape index: {}]
  %s2 = inlined_call_operand.vmem [shape: f32[1,32], index: 2, kind: input, shape index: {}]
  %s3 = inlined_call_operand.vmem [shape: f32[1,32], index: 3, kind: input, shape index: {}]
  %s4 = inlined_call_operand.vmem [shape: f32[32,4], index: 4, kind: input, shape index: {}]
  %s5 = inlined_call_operand.vmem [shape: f32[4,96], index: 5, kind: input, shape index: {}]
  %s6 = inlined_call_operand.hbm [shape: f32[16,96], index: 6, kind: output, shape index: {}]
  %s7 = sld [smem:[#allocation0]]
  $region57: #{tpu_custom_call.1} parent=0
    _
  %s9 = ssub.s32 1, %s7
  %s10 = scalar_select 0, %s9, %s7
  $region1: #{tpu_custom_call.1} parent=0
    #allocation2 [shape = 'u8[8192]{0}', space=vmem, size = 0x2000, scoped, tag = 'output window, operand 0']
    #allocation3 [shape = 's32[2]{0}', space=sflag, size = 0x8, scoped, tag = 'scoped memory for tpu_custom_call.1']
    %11 = vsyncpa [#allocation3], 0
    %s12 = scalar_lea.sflag [#allocation3], 1
    %13 = vsyncpa %s12, 0
    loop: start=0, step=1, limit=4
    $region2: #{tpu_custom_call.1} parent=1 // loop_pre_header
      _
    $region3: #{tpu_custom_call.1} parent=1 // loop_header
      %s15 = sphi 0, %s19
      %p16 = scmp.ge.s32.totalorder %s15, 4
      %s25 = sphi 0, %s27
      %s28 = sphi 0, %s25
      %s29 = sphi 0, %s28
      %s45 = sphi 0, %s29
      %s51 = sphi 0, %s53
      %s54 = sphi 0, %s51
      %s55 = sphi 0, %s54
      %s71 = sphi 0, %s55
      %s75 = sphi 0, %s75
      %s77 = sphi 0, %s75
      %s78 = sphi 0, %s77
      %s92 = sphi 0, %s78
      %s96 = sphi 0, %s96
      %s98 = sphi 0, %s96
      %s99 = sphi 0, %s98
      %s113 = sphi 0, %s99
      %s117 = sphi 0, %s117
      %s119 = sphi 0, %s117
      %s120 = sphi 0, %s119
      %s134 = sphi 0, %s120
      %s138 = sphi 0, %s138
      %s140 = sphi 0, %s138
      %s141 = sphi 0, %s140
      %s155 = sphi 0, %s141
      %s161 = sphi 0, %s163
      %s164 = sphi 0, %s161
      %s165 = sphi 0, %s164
      %s181 = sphi 0, %s165
    $region4: #{tpu_custom_call.1} parent=1 // loop_header_branch
      %18 = sbr.rel (%p16) target = $region8
    $region5: #{tpu_custom_call.1} parent=1 // loop_body
      %s20 = ssub.s32 %s15, 1
      %s21 = ssub.s32 %s15, 2
      %s22 = sadd.s32 %s15, 1
      %s23 = ssub.s32 %s15, %s22
      %p24 = scmp.eq.s32.totalorder %s23, 0
      %s26 = sadd.s32 %s25, 1
      %s27 = scalar_select %p24, %s25, %s26
      %p30 = pneg %p24
      %p31 = scmp.eq.s32.totalorder %s15, 1
      %p32 = por %p30, %p31
      %p33 = scmp.ne.s32.totalorder %s25, %s28
      %p34 = scmp.eq.s32.totalorder %s15, 0
      %p35 = por %p33, %p34
      %p36 = scmp.ne.s32.totalorder %s25, %s28
      %p37 = scmp.eq.s32.totalorder %s20, 1
      %p38 = por %p36, %p37
      %p39 = scmp.ne.s32.totalorder %s28, %s29
      %p40 = scmp.eq.s32.totalorder %s20, 0
      %p41 = por %p39, %p40
      %p42 = scmp.ne.s32.totalorder %s28, %s29
      %p43 = scmp.eq.s32.totalorder %s21, 1
      %p44 = por %p42, %p43
      %p46 = scmp.ne.s32.totalorder %s29, %s45
      %p47 = scmp.eq.s32.totalorder %s21, 0
      %p48 = por %p46, %p47
      %s49 = ssub.s32 %s15, %s22
      %p50 = scmp.eq.s32.totalorder %s49, 0
      %s52 = sadd.s32 %s51, 1
      %s53 = scalar_select %p50, %s51, %s52
      %p56 = pneg %p50
      %p57 = scmp.eq.s32.totalorder %s15, 1
      %p58 = por %p56, %p57
      %p59 = scmp.ne.s32.totalorder %s51, %s54
      %p60 = scmp.eq.s32.totalorder %s15, 0
      %p61 = por %p59, %p60
      %p62 = scmp.ne.s32.totalorder %s51, %s54
      %p63 = scmp.eq.s32.totalorder %s20, 1
      %p64 = por %p62, %p63
      %p65 = scmp.ne.s32.totalorder %s54, %s55
      %p66 = scmp.eq.s32.totalorder %s20, 0
      %p67 = por %p65, %p66
      %p68 = scmp.ne.s32.totalorder %s54, %s55
      %p69 = scmp.eq.s32.totalorder %s21, 1
      %p70 = por %p68, %p69
      %p72 = scmp.ne.s32.totalorder %s55, %s71
      %p73 = scmp.eq.s32.totalorder %s21, 0
      %p74 = por %p72, %p73
      %s76 = sadd.s32 %s75, 1
      %p79 = scmp.eq.s32.totalorder %s15, 1
      %p80 = scmp.ne.s32.totalorder %s75, %s77
      %p81 = scmp.eq.s32.totalorder %s15, 0
      %p82 = por %p80, %p81
      %p83 = scmp.ne.s32.totalorder %s75, %s77
      %p84 = scmp.eq.s32.totalorder %s20, 1
      %p85 = por %p83, %p84
      %p86 = scmp.ne.s32.totalorder %s77, %s78
      %p87 = scmp.eq.s32.totalorder %s20, 0
      %p88 = por %p86, %p87
      %p89 = scmp.ne.s32.totalorder %s77, %s78
      %p90 = scmp.eq.s32.totalorder %s21, 1
      %p91 = por %p89, %p90
      %p93 = scmp.ne.s32.totalorder %s78, %s92
      %p94 = scmp.eq.s32.totalorder %s21, 0
      %p95 = por %p93, %p94
      %s97 = sadd.s32 %s96, 1
      %p100 = scmp.eq.s32.totalorder %s15, 1
      %p101 = scmp.ne.s32.totalorder %s96, %s98
      %p102 = scmp.eq.s32.totalorder %s15, 0
      %p103 = por %p101, %p102
      %p104 = scmp.ne.s32.totalorder %s96, %s98
      %p105 = scmp.eq.s32.totalorder %s20, 1
      %p106 = por %p104, %p105
      %p107 = scmp.ne.s32.totalorder %s98, %s99
      %p108 = scmp.eq.s32.totalorder %s20, 0
      %p109 = por %p107, %p108
      %p110 = scmp.ne.s32.totalorder %s98, %s99
      %p111 = scmp.eq.s32.totalorder %s21, 1
      %p112 = por %p110, %p111
      %p114 = scmp.ne.s32.totalorder %s99, %s113
      %p115 = scmp.eq.s32.totalorder %s21, 0
      %p116 = por %p114, %p115
      %s118 = sadd.s32 %s117, 1
      %p121 = scmp.eq.s32.totalorder %s15, 1
      %p122 = scmp.ne.s32.totalorder %s117, %s119
      %p123 = scmp.eq.s32.totalorder %s15, 0
      %p124 = por %p122, %p123
      %p125 = scmp.ne.s32.totalorder %s117, %s119
      %p126 = scmp.eq.s32.totalorder %s20, 1
      %p127 = por %p125, %p126
      %p128 = scmp.ne.s32.totalorder %s119, %s120
      %p129 = scmp.eq.s32.totalorder %s20, 0
      %p130 = por %p128, %p129
      %p131 = scmp.ne.s32.totalorder %s119, %s120
      %p132 = scmp.eq.s32.totalorder %s21, 1
      %p133 = por %p131, %p132
      %p135 = scmp.ne.s32.totalorder %s120, %s134
      %p136 = scmp.eq.s32.totalorder %s21, 0
      %p137 = por %p135, %p136
      %s139 = sadd.s32 %s138, 1
      %p142 = scmp.eq.s32.totalorder %s15, 1
      %p143 = scmp.ne.s32.totalorder %s138, %s140
      %p144 = scmp.eq.s32.totalorder %s15, 0
      %p145 = por %p143, %p144
      %p146 = scmp.ne.s32.totalorder %s138, %s140
      %p147 = scmp.eq.s32.totalorder %s20, 1
      %p148 = por %p146, %p147
      %p149 = scmp.ne.s32.totalorder %s140, %s141
      %p150 = scmp.eq.s32.totalorder %s20, 0
      %p151 = por %p149, %p150
      %p152 = scmp.ne.s32.totalorder %s140, %s141
      %p153 = scmp.eq.s32.totalorder %s21, 1
      %p154 = por %p152, %p153
      %p156 = scmp.ne.s32.totalorder %s141, %s155
      %p157 = scmp.eq.s32.totalorder %s21, 0
      %p158 = por %p156, %p157
      %s159 = ssub.s32 %s15, %s22
      %p160 = scmp.eq.s32.totalorder %s159, 0
      %s162 = sadd.s32 %s161, 1
      %s163 = scalar_select %p160, %s161, %s162
      %p166 = pneg %p160
      %p167 = scmp.eq.s32.totalorder %s15, 1
      %p168 = por %p166, %p167
      %p169 = scmp.ne.s32.totalorder %s161, %s164
      %p170 = scmp.eq.s32.totalorder %s15, 0
      %p171 = por %p169, %p170
      %p172 = scmp.ne.s32.totalorder %s161, %s164
      %p173 = scmp.eq.s32.totalorder %s20, 1
      %p174 = por %p172, %p173
      %p175 = scmp.ne.s32.totalorder %s164, %s165
      %p176 = scmp.eq.s32.totalorder %s20, 0
      %p177 = por %p175, %p176
      %p178 = scmp.ne.s32.totalorder %s164, %s165
      %p179 = scmp.eq.s32.totalorder %s21, 1
      %p180 = por %p178, %p179
      %p182 = scmp.ne.s32.totalorder %s165, %s181
      %p183 = scmp.eq.s32.totalorder %s21, 0
      %p184 = por %p182, %p183
      %p185 = scmp.le.s32.totalorder 1, %s15
      %p186 = scmp.lt.s32.totalorder %s15, 3
      %p187 = pnand %p185, %p186
      %p188 = pneg %p187
      // Predicated region
      $region9: #{tpu_custom_call.1} parent=5 // pred_check
        _
      $region10: #{tpu_custom_call.1} parent=5 // pred_check_branch
        %190 = sbr.rel (%p187) target = $region12
      $region11: #{tpu_custom_call.1} parent=5 // pred_region
        %s191 = ssub.s32 %s15, 1
        // Predicated region
        $region13: #{tpu_custom_call.1} parent=11 // pred_check
          %p192 = pneg %p88
        $region14: #{tpu_custom_call.1} parent=11 // pred_check_branch
          %194 = sbr.rel (%p192) target = $region16
        $region15: #{tpu_custom_call.1} parent=11 // pred_region
          _
        $region16: #{tpu_custom_call.1} parent=11 // pred_fallthru
          _
        // Predicated region
        $region17: #{tpu_custom_call.1} parent=11 // pred_check
          %p195 = pneg %p109
        $region18: #{tpu_custom_call.1} parent=11 // pred_check_branch
          %197 = sbr.rel (%p195) target = $region20
        $region19: #{tpu_custom_call.1} parent=11 // pred_region
          _
        $region20: #{tpu_custom_call.1} parent=11 // pred_fallthru
          _
        // Predicated region
        $region21: #{tpu_custom_call.1} parent=11 // pred_check
          %p198 = pneg %p130
        $region22: #{tpu_custom_call.1} parent=11 // pred_check_branch
          %200 = sbr.rel (%p198) target = $region24
        $region23: #{tpu_custom_call.1} parent=11 // pred_region
          _
        $region24: #{tpu_custom_call.1} parent=11 // pred_fallthru
          _
        // Predicated region
        $region25: #{tpu_custom_call.1} parent=11 // pred_check
          %p201 = pneg %p151
        $region26: #{tpu_custom_call.1} parent=11 // pred_check_branch
          %203 = sbr.rel (%p201) target = $region28
        $region27: #{tpu_custom_call.1} parent=11 // pred_region
          _
        $region28: #{tpu_custom_call.1} parent=11 // pred_fallthru
          _
      $region12: #{tpu_custom_call.1} parent=5 // pred_fallthru
        _
      %p204 = scmp.lt.s32.totalorder %s15, 2
      // Predicated region
      $region29: #{tpu_custom_call.1} parent=5 // pred_check
        %p205 = pneg %p204
      $region30: #{tpu_custom_call.1} parent=5 // pred_check_branch
        %207 = sbr.rel (%p205) target = $region32
      $region31: #{tpu_custom_call.1} parent=5 // pred_region
        // Predicated region
        $region33: #{tpu_custom_call.1} parent=31 // pred_check
          %p208 = pneg %p35
        $region34: #{tpu_custom_call.1} parent=31 // pred_check_branch
          %210 = sbr.rel (%p208) target = $region36
        $region35: #{tpu_custom_call.1} parent=31 // pred_region
          %p211 = scmp.lt.s32.totalorder %s15, 1
          %s212 = scalar_select %p211, %s15, 1
          %s213 = smul.addr %s212, 8
          %s214 = scalar_lea.vmem %s0, %s213
        $region36: #{tpu_custom_call.1} parent=31 // pred_fallthru
          _
        // Predicated region
        $region37: #{tpu_custom_call.1} parent=31 // pred_check
          %p215 = pneg %p61
        $region38: #{tpu_custom_call.1} parent=31 // pred_check_branch
          %217 = sbr.rel (%p215) target = $region40
        $region39: #{tpu_custom_call.1} parent=31 // pred_region
          %p218 = scmp.lt.s32.totalorder %s15, 1
          %s219 = scalar_select %p218, %s15, 1
          %s220 = smul.addr %s219, 8
          %s221 = scalar_lea.vmem %s1, %s220
        $region40: #{tpu_custom_call.1} parent=31 // pred_fallthru
          _
      $region32: #{tpu_custom_call.1} parent=5 // pred_fallthru
        _
      %p222 = scmp.le.s32.totalorder 1, %s15
      %p223 = scmp.lt.s32.totalorder %s15, 3
      %p224 = pnand %p222, %p223
      %p225 = pneg %p224
      // Predicated region
      $region41: #{tpu_custom_call.1} parent=5 // pred_check
        _
      $region42: #{tpu_custom_call.1} parent=5 // pred_check_branch
        %227 = sbr.rel (%p224) target = $region44
      $region43: #{tpu_custom_call.1} parent=5 // pred_region
        %s228 = ssub.s32 %s15, 1
        %p229 = scmp.lt.s32.totalorder %s20, 1
        %s230 = scalar_select %p229, %s20, 1
        %s231 = smul.addr %s230, 8
        %s232 = scalar_lea.vmem %s0, %s231
        %p233 = pneg %p41
        %p234 = pneg %p38
        %p235 = scmp.lt.s32.totalorder %s20, 1
        %s236 = scalar_select %p235, %s20, 1
        %s237 = smul.addr %s236, 8
        %s238 = scalar_lea.vmem %s1, %s237
        %p239 = pneg %p67
        %p240 = pneg %p64
        %p241 = pneg %p88
        %p242 = pneg %p85
        %p243 = pneg %p109
        %p244 = pneg %p106
        %p245 = pneg %p130
        %p246 = pneg %p127
        %p247 = pneg %p151
        %p248 = pneg %p148
        %p249 = pneg %p177
        %p250 = pneg %p174
        %s251 = sand.u32 %s164, 1
        %s252 = scalar_lea.sflag [#allocation3], %s251
        %s253 = sand.u32 %s164, 1
        %s254 = smul.addr %s253, 8
        %s255 = scalar_lea.vmem [#allocation2], %s254
        %p256 = scmp.lt.s32.totalorder %s20, 1
        %s257 = scalar_select %p256, %s20, 1
        %s258 = smul.addr %s257, 8
        %s259 = scalar_lea.vmem %s0, %s258
        %p260 = scmp.lt.s32.totalorder %s20, 1
        %s261 = scalar_select %p260, %s20, 1
        %s262 = smul.addr %s261, 8
        %s263 = scalar_lea.vmem %s1, %s262
        %v264 = vld [vmem:[%s263] sm:$0xff]
        %v265 = vld [vmem:[%s2] sm:$0x1]
        %267 = vset.pattern.permute.xlu0 0
        %268 = vperm.xlu0 %267, %v264
        %v269 = vpop.permute.xlu0 %268
        %v272 = vlaneseq
        %v273 = vshrl.u32 %v272, 7
        %v274 = vsub.s32 0, %v273
        %v275 = vrot.slane %v265, %v274
        %v277 = vmul.f32 %v269, %v275
        %v278 = vld [vmem:[%s3] sm:$0x1]
        %v280 = vlaneseq
        %v281 = vshrl.u32 %v280, 7
        %v282 = vsub.s32 0, %v281
        %v283 = vrot.slane %v278, %v282
        %v285 = vadd.f32 %v277, %v283
        %v286 = vand.u32 2147483647, %v285
        %vm287 = vcmp.le.f32.partialorder %v286, 0.7853982
        %vm288 = vcmp.lt.s32.totalorder %v285, 0
        %v289 = vand.u32 %v285, 2139095040
        %v290 = vshrl.u32 %v289, 23
        %v291 = vsub.s32 %v290, 127
        %v292 = vand.u32 2147483647, %v285
        %v293 = vand.u32 %v292, 8388607
        %v294 = vor.u32 %v293, 8388608
        %v295 = vsub.s32 0, %v294
        %v296 = vadd.s32 %v291, 1
        %vm297 = vcmp.gt.s32.totalorder %v296, 0
        %v298 = vsel %vm297, %v296, 0
        %v299 = vshrl.u32 %v298, 5
        %v300 = vand.u32 %v298, 31
        %v301 = vsub.s32 32, %v300
        %v302 = vshrl.u32 683565275, %v301
        %v303 = vshll.u32 683565275, %v300
        %v304 = vshrl.u32 2475754826, %v301
        %v305 = vor.u32 %v303, %v304
        %v306 = vshll.u32 2475754826, %v300
        %v307 = vshrl.u32 2131351028, %v301
        %v308 = vor.u32 %v306, %v307
        %v309 = vshll.u32 2131351028, %v300
        %v310 = vshrl.u32 2102212464, %v301
        %v311 = vor.u32 %v309, %v310
        %v312 = vshll.u32 2102212464, %v300
        %v313 = vshrl.u32 920167782, %v301
        %v314 = vor.u32 %v312, %v313
        %v315 = vshll.u32 920167782, %v300
        %v316 = vshrl.u32 1326507024, %v301
        %v317 = vor.u32 %v315, %v316
        %vm318 = vcmp.lt.s32.totalorder %v299, 1
        %vm319 = vcmp.lt.s32.totalorder %v299, 2
        %vm320 = vcmp.lt.s32.totalorder %v299, 3
        %vm321 = vcmp.lt.s32.totalorder %v299, 4
        %v322 = vsel %vm318, %v302, %v305
        %v323 = vsel %vm321, %v311, 2102212464
        %v324 = vsel %vm320, %v308, %v323
        %v325 = vsel %vm319, %v322, %v324
        %v326 = vsel %vm318, %v305, %v308
        %v327 = vsel %vm321, %v314, 920167782
        %v328 = vsel %vm320, %v311, %v327
        %v329 = vsel %vm319, %v326, %v328
        %v330 = vsel %vm318, %v308, %v311
        %v331 = vsel %vm321, %v317, 1326507024
        %v332 = vsel %vm320, %v314, %v331
        %v333 = vsel %vm319, %v330, %v332
        %v334 = vshll.u32 %v294, 8
        %v335 = vmul.u32.u64.compose %v334, %v333
        %v336 = vextract.low.u32 %v335
        %v337 = vextract.high.u32 %v335
        %v338 = vmul.u32.u64.compose %v334, %v329
        %v339 = vextract.low.u32 %v338
        %v340 = vextract.high.u32 %v338
        %v341 = vmul.u32 %v334, %v325
        %v342 = vadd.s32 %v337, %v339
        %vm343 = vc.u32 %v337, %v339
        %v344 = vadd.s32 %v340, 1
        %v345 = vsel %vm343, %v344, %v340
        %v346 = vadd.s32 %v341, %v345
        %v347 = vadd.s32 %v346, 536870912
        %v348 = vshrl.u32 %v347, 30
        %v349 = vshll.u32 %v348, 30
        %v350 = vsub.s32 %v346, %v349
        %vm351 = vcmp.lt.s32.totalorder %v350, 0
        %v352 = vsub.s32 0, %v350
        %v353 = vsel %vm351, %v352, %v350
        %v354 = vclz %v353
        %v355 = vsub.s32 %v354, 2
        %vm356 = vcmp.gt.s32.totalorder 0, %v355
        %v357 = vsel %vm356, 0, %v355
        %v358 = vsub.s32 32, %v357
        %v359 = vshll.u32 %v350, %v357
        %v360 = vshrl.u32 %v342, %v358
        %v361 = vor.u32 %v359, %v360
        %v362 = vsub.s32 4294967266, %v357
        %v363 = vadd.s32 %v362, 127
        %v364 = vshll.u32 %v363, 23
        %v365 = vor.u32 4788187, %v364
        %v366 = vand.u32 2147483647, %v365
        %v368 = vcvt.s32.f32 %v361
        %v369 = vmul.f32 %v368, %v366
        %v370 = vxor.u32 %v369, 2147483648
        %v371 = vsel %vm288, %v370, %v369
        %v372 = vsub.s32 4, %v348
        %v373 = vsel %vm288, %v372, %v348
        %v374 = vsel %vm287, %v285, %v371
        %v375 = vsel %vm287, 0, %v373
        %v376 = vcosq.f32.pop %v374
        %v377 = vsinq.f32.pop %v374
        %vm378 = vweird.f32 %v285
        %v379 = vand.u32 %v375, 3
        %vm380 = vcmp.lt.s32.totalorder %v379, 2
        %vm381 = vcmp.eq.s32.totalorder %v379, 0
        %v382 = vxor.u32 %v377, 2147483648
        %v383 = vsel %vm381, %v376, %v382
        %vm384 = vcmp.eq.s32.totalorder %v379, 2
        %v385 = vxor.u32 %v376, 2147483648
        %v386 = vsel %vm384, %v385, %v377
        %v387 = vsel %vm380, %v383, %v386
        %v388 = vsel %vm378, nan, %v387
        %v389 = vld [vmem:[%s4] sm:$0xff]
        %v390 = vld [vmem:[%s4 + $0x8] sm:$0xff]
        %v391 = vld [vmem:[%s4 + $0x10] sm:$0xff]
        %v392 = vld [vmem:[%s4 + $0x18] sm:$0xff]
        %vm393 = vcmask 261120
        %v395 = vsel %vm393, %v388, 0
        %397 = vmatprep.subr.mxu0 0.0
        %398 = vmatpush1.msra.mxu0 %v389
        %399 = vmatprep.subr.mxu0 0.0
        %400 = vmatpush1.msra.mxu0 %v390
        %401 = vmatprep.subr.mxu0 0.0
        %402 = vmatpush1.msra.mxu0 %v391
        %403 = vmatprep.subr.mxu0 0.0
        %404 = vmatpush1.msra.mxu0 %v392
        %405 = vmatprep.subr.mxu0 0.0
        %406 = vmatpush1.msra.mxu0 0.0
        %407 = vmatprep.subr.mxu0 0.0
        %408 = vmatpush1.msra.mxu0 0.0
        %409 = vmatprep.subr.mxu0 0.0
        %410 = vmatpush1.msra.mxu0 0.0
        %411 = vmatprep.subr.mxu0 0.0
        %412 = vmatpush1.msra.mxu0 0.0
        %413 = vmatprep.subr.mxu0 0.0
        %414 = vmatpush1.msra.mxu0 0.0
        %415 = vmatprep.subr.mxu0 0.0
        %416 = vmatpush1.msra.mxu0 0.0
        %417 = vmatprep.subr.mxu0 0.0
        %418 = vmatpush1.msra.mxu0 0.0
        %419 = vmatprep.subr.mxu0 0.0
        %420 = vmatpush1.msra.mxu0 0.0
        %421 = vmatprep.subr.mxu0 0.0
        %422 = vmatpush1.msra.mxu0 0.0
        %423 = vmatprep.subr.mxu0 0.0
        %424 = vmatpush1.msra.mxu0 0.0
        %425 = vmatprep.subr.mxu0 0.0
        %426 = vmatpush1.msra.mxu0 0.0
        %427 = vmatprep.subr.mxu0 0.0
        %428 = vmatpush1.msra.mxu0 0.0
        %429 = vmatprep.subr.mxu0 0.0
        %430 = vmatpush1.msra.mxu0 0.0
        %431 = vmatprep.subr.mxu0 0.0
        %432 = vmatpush1.msra.mxu0 0.0
        %433 = vmatprep.subr.mxu0 0.0
        %434 = vmatpush1.msra.mxu0 0.0
        %435 = vmatprep.subr.mxu0 0.0
        %436 = vmatpush1.msra.mxu0 0.0
        %437 = vmatprep.subr.mxu0 0.0
        %438 = vmatpush1.msra.mxu0 0.0
        %439 = vmatprep.subr.mxu0 0.0
        %440 = vmatpush1.msra.mxu0 0.0
        %441 = vmatprep.subr.mxu0 0.0
        %442 = vmatpush1.msra.mxu0 0.0
        %443 = vmatprep.subr.mxu0 0.0
        %444 = vmatpush1.msra.mxu0 0.0
        %445 = vmatprep.subr.mxu0 0.0
        %446 = vmatpush1.msra.mxu0 0.0
        %447 = vmatprep.subr.mxu0 0.0
        %448 = vmatpush1.msra.mxu0 0.0
        %449 = vmatprep.subr.mxu0 0.0
        %450 = vmatpush1.msra.mxu0 0.0
        %451 = vmatprep.subr.mxu0 0.0
        %452 = vmatpush1.msra.mxu0 0.0
        %453 = vmatprep.subr.mxu0 0.0
        %454 = vmatpush1.msra.mxu0 0.0
        %455 = vmatprep.subr.mxu0 0.0
        %456 = vmatpush1.msra.mxu0 0.0
        %457 = vmatprep.subr.mxu0 0.0
        %458 = vmatpush1.msra.mxu0 0.0
        %459 = vmatprep.subr.mxu0 0.0
        %460 = vmatpush1.msra.mxu0 0.0
        %461 = vmatprep.mubr.f32.mxu0 0.0
        %462 = vmatmul.mubr.f32.gmra.mrb[0].mxu0 %v395
        %v463 = vpop.f32.mrb[0].mxu0
        %v464 = vadd.f32 0.0, %v463
        %v465 = vpop.f32.mrb[0].mxu0
        %466 = vdwg.mxu0
        %468 = vrot.lane.b32.xlu0 %v464, 1
        %v469 = vpop.permute.xlu0 %468
        %v471 = vadd.f32 %v264, %v469
        %vm472 = vcmask 39944
        %v473 = vsel %vm472, %v471, -inf
        %474 = vmax.xlane.f32.xlu0 %v473
        %v475 = vpop.xlane.xlu0 %474
        %v476 = vsub.f32 %v471, %v475
        %v477 = vmul.f32 %v476, 1.442695
        %v478 = vpow.pop %v477
        %480 = vrot.lane.b32.xlu0 %v478, 127
        %v481 = vpop.permute.xlu0 %480
        %vm483 = vcmask 31744
        %v484 = vsel %vm483, %v481, 0.0
        %485 = vadd.xlane.f32.xlu0 %v484
        %v486 = vpop.xlane.xlu0 %485
        %v487 = vrcp.pop %v486
        %v488 = vmul.f32 %v478, %v487
        %v489 = vld [vmem:[%s5] sm:$0xf]
        %491 = vrot.lane.b32.xlu0 %v488, 127
        %v492 = vpop.permute.xlu0 %491
        %v493 = vsel %vm483, %v492, 0
        %vm495 = vcmask 1043456
        %v497 = vsel %vm495, %v489, 0
        %499 = vmatprep.subr.mxu0 0.0
        %500 = vmatpush1.msra.mxu0 %v497
        %501 = vmatprep.subr.mxu0 0.0
        %502 = vmatpush1.msra.mxu0 0.0
        %503 = vmatprep.subr.mxu0 0.0
        %504 = vmatpush1.msra.mxu0 0.0
        %505 = vmatprep.subr.mxu0 0.0
        %506 = vmatpush1.msra.mxu0 0.0
        %507 = vmatprep.subr.mxu0 0.0
        %508 = vmatpush1.msra.mxu0 0.0
        %509 = vmatprep.subr.mxu0 0.0
        %510 = vmatpush1.msra.mxu0 0.0
        %511 = vmatprep.subr.mxu0 0.0
        %512 = vmatpush1.msra.mxu0 0.0
        %513 = vmatprep.subr.mxu0 0.0
        %514 = vmatpush1.msra.mxu0 0.0
        %515 = vmatprep.subr.mxu0 0.0
        %516 = vmatpush1.msra.mxu0 0.0
        %517 = vmatprep.subr.mxu0 0.0
        %518 = vmatpush1.msra.mxu0 0.0
        %519 = vmatprep.subr.mxu0 0.0
        %520 = vmatpush1.msra.mxu0 0.0
        %521 = vmatprep.subr.mxu0 0.0
        %522 = vmatpush1.msra.mxu0 0.0
        %523 = vmatprep.subr.mxu0 0.0
        %524 = vmatpush1.msra.mxu0 0.0
        %525 = vmatprep.subr.mxu0 0.0
        %526 = vmatpush1.msra.mxu0 0.0
        %527 = vmatprep.subr.mxu0 0.0
        %528 = vmatpush1.msra.mxu0 0.0
        %529 = vmatprep.subr.mxu0 0.0
        %530 = vmatpush1.msra.mxu0 0.0
        %531 = vmatprep.subr.mxu0 0.0
        %532 = vmatpush1.msra.mxu0 0.0
        %533 = vmatprep.subr.mxu0 0.0
        %534 = vmatpush1.msra.mxu0 0.0
        %535 = vmatprep.subr.mxu0 0.0
        %536 = vmatpush1.msra.mxu0 0.0
        %537 = vmatprep.subr.mxu0 0.0
        %538 = vmatpush1.msra.mxu0 0.0
        %539 = vmatprep.subr.mxu0 0.0
        %540 = vmatpush1.msra.mxu0 0.0
        %541 = vmatprep.subr.mxu0 0.0
        %542 = vmatpush1.msra.mxu0 0.0
        %543 = vmatprep.subr.mxu0 0.0
        %544 = vmatpush1.msra.mxu0 0.0
        %545 = vmatprep.subr.mxu0 0.0
        %546 = vmatpush1.msra.mxu0 0.0
        %547 = vmatprep.subr.mxu0 0.0
        %548 = vmatpush1.msra.mxu0 0.0
        %549 = vmatprep.subr.mxu0 0.0
        %550 = vmatpush1.msra.mxu0 0.0
        %551 = vmatprep.subr.mxu0 0.0
        %552 = vmatpush1.msra.mxu0 0.0
        %553 = vmatprep.subr.mxu0 0.0
        %554 = vmatpush1.msra.mxu0 0.0
        %555 = vmatprep.subr.mxu0 0.0
        %556 = vmatpush1.msra.mxu0 0.0
        %557 = vmatprep.subr.mxu0 0.0
        %558 = vmatpush1.msra.mxu0 0.0
        %559 = vmatprep.subr.mxu0 0.0
        %560 = vmatpush1.msra.mxu0 0.0
        %561 = vmatprep.subr.mxu0 0.0
        %562 = vmatpush1.msra.mxu0 0.0
        %563 = vmatprep.mubr.f32.mxu0 0.0
        %564 = vmatmul.mubr.f32.gmra.mrb[0].mxu0 %v493
        %v565 = vpop.f32.mrb[0].mxu0
        %v566 = vadd.f32 0.0, %v565
        %v567 = vpop.f32.mrb[0].mxu0
        %568 = vdwg.mxu0
        %v569 = vld [vmem:[%s259] sm:$0xff]
        %v570 = vmul.f32 %v569, %v566
        %vm571 = vcmask 785408
        %572 = vst.msk [vmem:[%s255] sm:$0xff] %vm571, %v570
        %s573 = sand.u32 %s164, 1
        %s574 = scalar_lea.sflag [#allocation3], %s573
        %s575 = sand.u32 %s164, 1
        %s576 = smul.addr %s575, 8
        %s577 = scalar_lea.vmem [#allocation2], %s576
        // Predicated region
        $region45: #{tpu_custom_call.1} parent=43 // pred_check
          %p578 = pneg %p174
        $region46: #{tpu_custom_call.1} parent=43 // pred_check_branch
          %580 = sbr.rel (%p578) target = $region48
        $region47: #{tpu_custom_call.1} parent=43 // pred_region
          %s582 = ssub.s32 128, 128
          %583 = vsyncadd %s574, %s582
          %s584 = smul.addr %s20, 128
          %s585 = scalar_lea.hbm %s6, %s584
          %s587 = sshll.u32 %s577, 4
          %s588 = int_to_ptr.vmem [resolvable:$true] %s587
          %590 = dma.vmem_to_hbm [thread:$0]  %s588, 128, %s585, %s574
        $region48: #{tpu_custom_call.1} parent=43 // pred_fallthru
          _
      $region44: #{tpu_custom_call.1} parent=5 // pred_fallthru
        _
      %p591 = scmp.le.s32.totalorder 2, %s15
      // Predicated region
      $region49: #{tpu_custom_call.1} parent=5 // pred_check
        %p592 = pneg %p591
      $region50: #{tpu_custom_call.1} parent=5 // pred_check_branch
        %594 = sbr.rel (%p592) target = $region52
      $region51: #{tpu_custom_call.1} parent=5 // pred_region
        %s595 = ssub.s32 %s15, 2
        // Predicated region
        $region53: #{tpu_custom_call.1} parent=51 // pred_check
          %p596 = pneg %p180
        $region54: #{tpu_custom_call.1} parent=51 // pred_check_branch
          %598 = sbr.rel (%p596) target = $region56
        $region55: #{tpu_custom_call.1} parent=51 // pred_region
          %s599 = sand.u32 %s165, 1
          %s600 = scalar_lea.sflag [#allocation3], %s599
          %s601 = sand.u32 %s165, 1
          %s602 = smul.addr %s601, 8
          %s603 = scalar_lea.vmem [#allocation2], %s602
          %604 = dma.done %s600, 128
        $region56: #{tpu_custom_call.1} parent=51 // pred_fallthru
          _
      $region52: #{tpu_custom_call.1} parent=5 // pred_fallthru
        _
    $region6: #{tpu_custom_call.1} parent=1 // loop_footer
      %s19 = sadd.s32 1, %s15
    $region7: #{tpu_custom_call.1} parent=1 // loop_footer_branch
      %14 = sbr.rel target = $region3
    $region8: #{tpu_custom_call.1} parent=1 // loop_exit
      _
    %605 = vsyncpa [#allocation3], 1
    %s606 = scalar_lea.sflag [#allocation3], 1
    %607 = vsyncpa %s606, 1

</llo_original>
